<compile_context>
chip_gen: v7x
topology: tpu7x:2x2x1
jax: 0.10.0
libtpu: 0.0.40
codegen_flags: <defaults>
</compile_context>

<pallas_src>
import functools

import jax
import jax.numpy as jnp
from jax.experimental import pallas as pl
from jax.experimental.pallas import tpu as pltpu


def _round_up(x, m):
    return ((x + m - 1) // m) * m


def _agg_kernel(soft_ref, latent_ref, interval_ref, out_ref, *, K, L, D):
    # soft_ref:     (tn, K)     cluster membership weights
    # latent_ref:   (tn, K*L)   subsegment assignments, flattened k-major
    # interval_ref: (tn, L*D)   per-subcluster stock views, flattened l-major
    # out_ref:      (tn, D)
    soft = soft_ref[...].astype(jnp.float32)        # (tn, K)
    latent = latent_ref[...].astype(jnp.float32)    # (tn, K*L)

    # combined[n, l] = sum_k soft[n, k] * latent[n, k, l]   (K tiny & static -> unrolled)
    combined = soft[:, 0:1] * latent[:, 0:L]
    for k in range(1, K):
        combined = combined + soft[:, k:k + 1] * latent[:, k * L:(k + 1) * L]

    # final[n, d] = sum_l combined[n, l] * interval[n, l, d]  (L tiny & static -> unrolled)
    acc = combined[:, 0:1] * interval_ref[:, 0:D].astype(jnp.float32)
    for l in range(1, L):
        acc = acc + combined[:, l:l + 1] * interval_ref[:, l * D:(l + 1) * D].astype(jnp.float32)

    out_ref[...] = acc.astype(out_ref.dtype)


def inter_cluster_aggregate(stock_embs, soft_cluster_weights,
                            latent_subsegment_assignments, interval_outputs,
                            *, tile_n=None):
    """interval_outputs: stacked array of shape (n_subclusters, N, hidden_dim)."""
    N, D = stock_embs.shape
    K = soft_cluster_weights.shape[1]
    L = interval_outputs.shape[0]

    # Wrapper-side layout plumbing (cheap relative to the kernel's HBM traffic).
    interval_flat = jnp.transpose(interval_outputs, (1, 0, 2)).reshape(N, L * D)
    latent_flat = latent_subsegment_assignments.reshape(N, K * L)
    soft = soft_cluster_weights

    # Tile selection: big row tiles for DMA efficiency; a single grid step for
    # small N, multiple steps for large N (keeps both v7x TensorCores busy).
    if tile_n is None:
        tile_n = min(_round_up(N, 8), 1024)
    tile_n = max(8, _round_up(int(tile_n), 8))
    n_pad = _round_up(N, tile_n)

    if n_pad != N:
        pad = n_pad - N
        soft = jnp.pad(soft, ((0, pad), (0, 0)))
        latent_flat = jnp.pad(latent_flat, ((0, pad), (0, 0)))
        interval_flat = jnp.pad(interval_flat, ((0, pad), (0, 0)))

    grid = (n_pad // tile_n,)
    kernel = functools.partial(_agg_kernel, K=K, L=L, D=D)

    out = pl.pallas_call(
        kernel,
        out_shape=jax.ShapeDtypeStruct((n_pad, D), stock_embs.dtype),
        grid_spec=pltpu.PrefetchScalarGridSpec(
            num_scalar_prefetch=0,
            grid=grid,
            in_specs=[
                pl.BlockSpec((tile_n, K), lambda i: (i, 0)),
                pl.BlockSpec((tile_n, K * L), lambda i: (i, 0)),
                pl.BlockSpec((tile_n, L * D), lambda i: (i, 0)),
            ],
            out_specs=pl.BlockSpec((tile_n, D), lambda i: (i, 0)),
        ),
        compiler_params=pltpu.CompilerParams(
            dimension_semantics=("parallel",)),
    )(soft, latent_flat, interval_flat)

    return out[:N]


def _reference(stock_embs, soft, latent, interval):
    # pure-JAX reference mirroring the PyTorch loops
    combined = jnp.einsum("nk,nkl->nl", soft, latent)
    return jnp.einsum("nl,lnd->nd", combined, interval).astype(stock_embs.dtype)


if __name__ == "__main__":
    # Module has no learnable parameters (hidden_dim / n_subclusters are config only).
    N = 16             # number of stocks
    hidden_dim = 32
    n_subclusters = 4
    current_n_clusters = 3

    key = jax.random.PRNGKey(0)
    k1, k2, k3, k4 = jax.random.split(key, 4)

    stock_embs = jax.random.normal(k1, (N, hidden_dim), dtype=jnp.float32)
    soft_cluster_weights = jax.nn.softmax(
        jax.random.normal(k2, (N, current_n_clusters), dtype=jnp.float32), axis=-1)
    latent_subsegment_assignments = jax.nn.softmax(
        jax.random.normal(k3, (N, current_n_clusters, n_subclusters), dtype=jnp.float32),
        axis=-1)
    # interval_outputs[l] is an (N, hidden_dim) view of the stocks for subcluster l
    interval_outputs = jax.random.normal(
        k4, (n_subclusters, N, hidden_dim), dtype=jnp.float32)

    out = inter_cluster_aggregate(
        stock_embs, soft_cluster_weights,
        latent_subsegment_assignments, interval_outputs)
    out = jax.block_until_ready(out)

    ref = _reference(stock_embs, soft_cluster_weights,
                     latent_subsegment_assignments, interval_outputs)
    assert out.shape == stock_embs.shape and out.dtype == stock_embs.dtype
    assert jnp.allclose(out, ref, atol=1e-5, rtol=1e-5), "mismatch vs reference"

    print("KERNEL_OK")
</pallas_src>

<mosaic_0001>
module attributes {stable_mosaic.version = 11 : i64} {
  func.func @_agg_kernel(%arg0: i32, %arg1: memref<16x3xf32, #tpu.memory_space<vmem>>, %arg2: memref<16x12xf32, #tpu.memory_space<vmem>>, %arg3: memref<16x128xf32, #tpu.memory_space<vmem>>, %arg4: memref<16x32xf32, #tpu.memory_space<vmem>>) attributes {dimension_semantics = [#tpu.dimension_semantics<parallel>], iteration_bounds = array<i64: 1>, scalar_prefetch = 0 : i64, scratch_operands = 0 : i64, tpu.core_type = #tpu.core_type<tc>, window_params = [{transform_indices = @transform_0, window_bounds = array<i64: 16, 3>}, {transform_indices = @transform_1, window_bounds = array<i64: 16, 12>}, {transform_indices = @transform_2, window_bounds = array<i64: 16, 128>}, {transform_indices = @transform_3, window_bounds = array<i64: 16, 32>}]} {
    %c0 = arith.constant 0 : index
    %c0_0 = arith.constant 0 : index
    %0 = vector.load %arg1[%c0, %c0_0] : memref<16x3xf32, #tpu.memory_space<vmem>>, vector<16x3xf32>
    %c0_1 = arith.constant 0 : index
    %c0_2 = arith.constant 0 : index
    %1 = vector.load %arg2[%c0_1, %c0_2] : memref<16x12xf32, #tpu.memory_space<vmem>>, vector<16x12xf32>
    %2 = vector.extract_strided_slice %0 {offsets = [0, 0], sizes = [16, 1], strides = [1, 1]} : vector<16x3xf32> to vector<16x1xf32>
    %3 = vector.extract_strided_slice %1 {offsets = [0, 0], sizes = [16, 4], strides = [1, 1]} : vector<16x12xf32> to vector<16x4xf32>
    %4 = vector.broadcast %2 : vector<16x1xf32> to vector<16x4xf32>
    %5 = arith.mulf %4, %3 : vector<16x4xf32>
    %6 = vector.extract_strided_slice %0 {offsets = [0, 1], sizes = [16, 1], strides = [1, 1]} : vector<16x3xf32> to vector<16x1xf32>
    %7 = vector.extract_strided_slice %1 {offsets = [0, 4], sizes = [16, 4], strides = [1, 1]} : vector<16x12xf32> to vector<16x4xf32>
    %8 = vector.broadcast %6 : vector<16x1xf32> to vector<16x4xf32>
    %9 = arith.mulf %8, %7 : vector<16x4xf32>
    %10 = arith.addf %5, %9 : vector<16x4xf32>
    %11 = vector.extract_strided_slice %0 {offsets = [0, 2], sizes = [16, 1], strides = [1, 1]} : vector<16x3xf32> to vector<16x1xf32>
    %12 = vector.extract_strided_slice %1 {offsets = [0, 8], sizes = [16, 4], strides = [1, 1]} : vector<16x12xf32> to vector<16x4xf32>
    %13 = vector.broadcast %11 : vector<16x1xf32> to vector<16x4xf32>
    %14 = arith.mulf %13, %12 : vector<16x4xf32>
    %15 = arith.addf %10, %14 : vector<16x4xf32>
    %16 = vector.extract_strided_slice %15 {offsets = [0, 0], sizes = [16, 1], strides = [1, 1]} : vector<16x4xf32> to vector<16x1xf32>
    %c0_3 = arith.constant 0 : index
    %c0_4 = arith.constant 0 : index
    %17 = vector.load %arg3[%c0_3, %c0_4] : memref<16x128xf32, #tpu.memory_space<vmem>>, vector<16x32xf32>
    %18 = vector.broadcast %16 : vector<16x1xf32> to vector<16x32xf32>
    %19 = arith.mulf %18, %17 : vector<16x32xf32>
    %20 = vector.extract_strided_slice %15 {offsets = [0, 1], sizes = [16, 1], strides = [1, 1]} : vector<16x4xf32> to vector<16x1xf32>
    %c0_5 = arith.constant 0 : index
    %c32 = arith.constant 32 : index
    %21 = vector.load %arg3[%c0_5, %c32] : memref<16x128xf32, #tpu.memory_space<vmem>>, vector<16x32xf32>
    %22 = vector.broadcast %20 : vector<16x1xf32> to vector<16x32xf32>
    %23 = arith.mulf %22, %21 : vector<16x32xf32>
    %24 = arith.addf %19, %23 : vector<16x32xf32>
    %25 = vector.extract_strided_slice %15 {offsets = [0, 2], sizes = [16, 1], strides = [1, 1]} : vector<16x4xf32> to vector<16x1xf32>
    %c0_6 = arith.constant 0 : index
    %c64 = arith.constant 64 : index
    %26 = vector.load %arg3[%c0_6, %c64] : memref<16x128xf32, #tpu.memory_space<vmem>>, vector<16x32xf32>
    %27 = vector.broadcast %25 : vector<16x1xf32> to vector<16x32xf32>
    %28 = arith.mulf %27, %26 : vector<16x32xf32>
    %29 = arith.addf %24, %28 : vector<16x32xf32>
    %30 = vector.extract_strided_slice %15 {offsets = [0, 3], sizes = [16, 1], strides = [1, 1]} : vector<16x4xf32> to vector<16x1xf32>
    %c0_7 = arith.constant 0 : index
    %c96 = arith.constant 96 : index
    %31 = vector.load %arg3[%c0_7, %c96] : memref<16x128xf32, #tpu.memory_space<vmem>>, vector<16x32xf32>
    %32 = vector.broadcast %30 : vector<16x1xf32> to vector<16x32xf32>
    %33 = arith.mulf %32, %31 : vector<16x32xf32>
    %34 = arith.addf %29, %33 : vector<16x32xf32>
    %c0_8 = arith.constant 0 : index
    %c0_9 = arith.constant 0 : index
    %35 = vector.load %arg4[%c0_8, %c0_9] : memref<16x32xf32, #tpu.memory_space<vmem>>, vector<16x32xf32>
    tpu.vector_store %arg4[%c0_8, %c0_9], %34 {strides = array<i32>} : memref<16x32xf32, #tpu.memory_space<vmem>>, vector<16x32xf32>,
    return
  }
  func.func @transform_0(%arg0: i32) -> (i32, i32) {
    %c0_i32 = arith.constant 0 : i32
    %c0_i32_0 = arith.constant 0 : i32
    return %arg0, %c0_i32 : i32, i32
  }
  func.func @transform_1(%arg0: i32) -> (i32, i32) {
    %c0_i32 = arith.constant 0 : i32
    %c0_i32_0 = arith.constant 0 : i32
    return %arg0, %c0_i32 : i32, i32
  }
  func.func @transform_2(%arg0: i32) -> (i32, i32) {
    %c0_i32 = arith.constant 0 : i32
    %c0_i32_0 = arith.constant 0 : i32
    return %arg0, %c0_i32 : i32, i32
  }
  func.func @transform_3(%arg0: i32) -> (i32, i32) {
    %c0_i32 = arith.constant 0 : i32
    %c0_i32_0 = arith.constant 0 : i32
    return %arg0, %c0_i32 : i32, i32
  }
}

</mosaic_0001>

<llo_original>
// kernel: tpu_custom_call.1
$region0: #{tpu_custom_call.1}
  #allocation0 [shape = 'u32[]', space=smem, size = 0x4, offset = 0x4, fixed_abs, tag = 'smem constant byte address 0x4 - core index']
  #allocation1 [shape = 'u32[144,128]{1,0:T(1,128)}', space=vmem, size = 0x12000, scoped, tag = 'internal scratch']
  %s0 = inlined_call_operand.vmem [shape: f32[16,3], index: 0, kind: input, shape index: {}]
  %s1 = inlined_call_operand.vmem [shape: f32[16,12], index: 1, kind: input, shape index: {}]
  %s2 = inlined_call_operand.hbm [shape: f32[16,128], index: 2, kind: input, shape index: {}]
  %s3 = inlined_call_operand.hbm [shape: f32[16,32], index: 3, kind: output, shape index: {}]
  %s4 = sld [smem:[#allocation0]]
  $region26: #{tpu_custom_call.1} parent=0
    _
  %s6 = ssub.s32 1, %s4
  %s7 = scalar_select 0, %s6, %s4
  $region1: #{tpu_custom_call.1} parent=0
    #allocation2 [shape = 'u8[8192]{0}', space=vmem, size = 0x2000, scoped, tag = 'input window, operand 2, single buffered']
    #allocation3 [shape = 's32[1]{0}', space=sflag, size = 0x4, scoped, tag = 'scoped memory for tpu_custom_call.1']
    #allocation4 [shape = 's32[1]{0}', space=sflag, size = 0x4, scoped, tag = 'scoped memory for tpu_custom_call.1']
    #allocation5 [shape = 'u8[8192]{0}', space=vmem, size = 0x2000, scoped, tag = 'output window, operand 0, single buffered']
    %8 = vsyncpa [#allocation3], 0
    %9 = vsyncpa [#allocation4], 0
    // Predicated region
    $region2: #{tpu_custom_call.1} parent=1 // pred_check
      _
    $region3: #{tpu_custom_call.1} parent=1 // pred_check_branch
      %11 = sbr.rel (0) target = $region5
    $region4: #{tpu_custom_call.1} parent=1 // pred_region
      _
    $region5: #{tpu_custom_call.1} parent=1 // pred_fallthru
      _
    // Predicated region
    $region6: #{tpu_custom_call.1} parent=1 // pred_check
      _
    $region7: #{tpu_custom_call.1} parent=1 // pred_check_branch
      %13 = sbr.rel (0) target = $region9
    $region8: #{tpu_custom_call.1} parent=1 // pred_region
      _
    $region9: #{tpu_custom_call.1} parent=1 // pred_fallthru
      _
    // Predicated region
    $region10: #{tpu_custom_call.1} parent=1 // pred_check
      _
    $region11: #{tpu_custom_call.1} parent=1 // pred_check_branch
      %15 = sbr.rel (0) target = $region13
    $region12: #{tpu_custom_call.1} parent=1 // pred_region
      %s17 = ssub.s32 256, 256
      %18 = vsyncadd [#allocation3], %s17
      %s19 = sshll.u32 [#allocation2], 4
      %s20 = int_to_ptr.vmem [resolvable:$true] %s19
      %25 = dma.hbm_to_vmem [thread:$0]  %s2, 256, %s20, [#allocation3], 128, 128, 8
    $region13: #{tpu_custom_call.1} parent=1 // pred_fallthru
      _
    // Predicated region
    $region14: #{tpu_custom_call.1} parent=1 // pred_check
      _
    $region15: #{tpu_custom_call.1} parent=1 // pred_check_branch
      %27 = sbr.rel (0) target = $region17
    $region16: #{tpu_custom_call.1} parent=1 // pred_region
      %28 = dma.done [#allocation3], 256
    $region17: #{tpu_custom_call.1} parent=1 // pred_fallthru
      _
    %v29 = vld [vmem:[%s0] sm:$0xff]
    %v30 = vld [vmem:[%s0 + $0x8] sm:$0xff]
    %v31 = vld [vmem:[%s1] sm:$0xff]
    %v32 = vld [vmem:[%s1 + $0x8] sm:$0xff]
    %34 = vset.pattern.permute.xlu0 0
    %35 = vperm.xlu0 %34, %v29
    %v36 = vpop.permute.xlu0 %35
    %39 = vset.pattern.permute.xlu0 0
    %40 = vperm.xlu0 %39, %v30
    %v41 = vpop.permute.xlu0 %40
    %v43 = vmul.f32 %v36, %v31
    %v44 = vmul.f32 %v41, %v32
    %45 = vset.pattern.permute.xlu0 1
    %46 = vperm.xlu0 %45, %v29
    %v47 = vpop.permute.xlu0 %46
    %49 = vset.pattern.permute.xlu0 1
    %50 = vperm.xlu0 %49, %v30
    %v51 = vpop.permute.xlu0 %50
    %v53 = vmul.f32 %v47, %v31
    %v54 = vmul.f32 %v51, %v32
    %57 = vrot.lane.b32.xlu0 %v53, 124
    %v58 = vpop.permute.xlu0 %57
    %59 = vrot.lane.b32.xlu0 %v54, 124
    %v60 = vpop.permute.xlu0 %59
    %v63 = vadd.f32 %v43, %v58
    %v64 = vadd.f32 %v44, %v60
    %65 = vset.pattern.permute.xlu0 2
    %66 = vperm.xlu0 %65, %v29
    %v67 = vpop.permute.xlu0 %66
    %69 = vset.pattern.permute.xlu0 2
    %70 = vperm.xlu0 %69, %v30
    %v71 = vpop.permute.xlu0 %70
    %v73 = vmul.f32 %v67, %v31
    %v74 = vmul.f32 %v71, %v32
    %77 = vrot.lane.b32.xlu0 %v73, 120
    %v78 = vpop.permute.xlu0 %77
    %79 = vrot.lane.b32.xlu0 %v74, 120
    %v80 = vpop.permute.xlu0 %79
    %v83 = vadd.f32 %v63, %v78
    %v84 = vadd.f32 %v64, %v80
    %v85 = vld [vmem:[#allocation2] sm:$0xff]
    %v86 = vld [vmem:[#allocation2 + $0x8] sm:$0xff]
    %88 = vset.pattern.permute.xlu0 0
    %89 = vperm.xlu0 %88, %v83
    %v90 = vpop.permute.xlu0 %89
    %93 = vset.pattern.permute.xlu0 0
    %94 = vperm.xlu0 %93, %v84
    %v95 = vpop.permute.xlu0 %94
    %v97 = vmul.f32 %v90, %v85
    %v98 = vmul.f32 %v95, %v86
    %99 = vset.pattern.permute.xlu0 1
    %100 = vperm.xlu0 %99, %v83
    %v101 = vpop.permute.xlu0 %100
    %103 = vset.pattern.permute.xlu0 1
    %104 = vperm.xlu0 %103, %v84
    %v105 = vpop.permute.xlu0 %104
    %v107 = vmul.f32 %v101, %v85
    %v108 = vmul.f32 %v105, %v86
    %111 = vrot.lane.b32.xlu0 %v107, 96
    %v112 = vpop.permute.xlu0 %111
    %113 = vrot.lane.b32.xlu0 %v108, 96
    %v114 = vpop.permute.xlu0 %113
    %v117 = vadd.f32 %v97, %v112
    %v118 = vadd.f32 %v98, %v114
    %119 = vset.pattern.permute.xlu0 2
    %120 = vperm.xlu0 %119, %v83
    %v121 = vpop.permute.xlu0 %120
    %123 = vset.pattern.permute.xlu0 2
    %124 = vperm.xlu0 %123, %v84
    %v125 = vpop.permute.xlu0 %124
    %v127 = vmul.f32 %v121, %v85
    %v128 = vmul.f32 %v125, %v86
    %131 = vrot.lane.b32.xlu0 %v127, 64
    %v132 = vpop.permute.xlu0 %131
    %133 = vrot.lane.b32.xlu0 %v128, 64
    %v134 = vpop.permute.xlu0 %133
    %v137 = vadd.f32 %v117, %v132
    %v138 = vadd.f32 %v118, %v134
    %139 = vset.pattern.permute.xlu0 3
    %140 = vperm.xlu0 %139, %v83
    %v141 = vpop.permute.xlu0 %140
    %143 = vset.pattern.permute.xlu0 3
    %144 = vperm.xlu0 %143, %v84
    %v145 = vpop.permute.xlu0 %144
    %v147 = vmul.f32 %v141, %v85
    %v148 = vmul.f32 %v145, %v86
    %151 = vrot.lane.b32.xlu0 %v147, 32
    %v152 = vpop.permute.xlu0 %151
    %153 = vrot.lane.b32.xlu0 %v148, 32
    %v154 = vpop.permute.xlu0 %153
    %v157 = vadd.f32 %v137, %v152
    %v158 = vadd.f32 %v138, %v154
    %vm159 = vcmask 261120
    %160 = vst.msk [vmem:[#allocation5] sm:$0xff] %vm159, %v157
    %161 = vst.msk [vmem:[#allocation5 + $0x8] sm:$0xff] %vm159, %v158
    // Predicated region
    $region18: #{tpu_custom_call.1} parent=1 // pred_check
      _
    $region19: #{tpu_custom_call.1} parent=1 // pred_check_branch
      %163 = sbr.rel (0) target = $region21
    $region20: #{tpu_custom_call.1} parent=1 // pred_region
      %s165 = ssub.s32 256, 256
      %166 = vsyncadd [#allocation4], %s165
      %s167 = sshll.u32 [#allocation5], 4
      %s168 = int_to_ptr.vmem [resolvable:$true] %s167
      %173 = dma.vmem_to_hbm [thread:$0]  %s168, 256, %s3, [#allocation4], 128, 128, 8
    $region21: #{tpu_custom_call.1} parent=1 // pred_fallthru
      _
    // Predicated region
    $region22: #{tpu_custom_call.1} parent=1 // pred_check
      _
    $region23: #{tpu_custom_call.1} parent=1 // pred_check_branch
      %175 = sbr.rel (0) target = $region25
    $region24: #{tpu_custom_call.1} parent=1 // pred_region
      %176 = dma.done [#allocation4], 256
    $region25: #{tpu_custom_call.1} parent=1 // pred_fallthru
      _
    %177 = vsyncpa [#allocation3], 1
    %178 = vsyncpa [#allocation4], 1

</llo_original>
